<compile_context>
chip_gen: v7x
topology: tpu7x:2x2x1
jax: 0.10.0
libtpu: 0.0.40
codegen_flags: <defaults>
</compile_context>

<pallas_src>
import functools

import jax
import jax.numpy as jnp
from jax.experimental import pallas as pl
from jax.experimental.pallas import tpu as pltpu

_LANE = 128


def _accum_rows(pred_ref, true_ref, st, sp, sqq, stp, r0, rm, n_cols):
    """Accumulate sufficient statistics over columns [0, n_cols) for rows
    [r0, r0+rm) of the current (bm, bt) block.  All offsets are static."""
    rows = pl.ds(r0, rm)
    n_full = n_cols // _LANE
    tail = n_cols - n_full * _LANE

    def load(ref, c):
        return ref[rows, pl.ds(c * _LANE, _LANE)].astype(jnp.float32)

    c = 0
    # Fold-by-2 over full lane tiles: halves accumulator read-modify-write
    # (vst) traffic.  rm <= 64 keeps the four live data tiles <= ~32 vregs.
    while c + 1 < n_full:
        t0, t1 = load(true_ref, c), load(true_ref, c + 1)
        p0, p1 = load(pred_ref, c), load(pred_ref, c + 1)
        st[rows, :] += t0 + t1
        sp[rows, :] += p0 + p1
        sqq[rows, :] += (t0 * t0 + t1 * t1) + (p0 * p0 + p1 * p1)
        stp[rows, :] += t0 * p0 + t1 * p1
        c += 2
    if c < n_full:  # odd leftover full lane tile
        t0, p0 = load(true_ref, c), load(pred_ref, c)
        st[rows, :] += t0
        sp[rows, :] += p0
        sqq[rows, :] += t0 * t0 + p0 * p0
        stp[rows, :] += t0 * p0
        c += 1
    if tail > 0:
        # Partial lane tile of a ragged T: columns >= tail hold unspecified
        # edge-block data, so mask the raw loads to zero before any product.
        t0, p0 = load(true_ref, n_full), load(pred_ref, n_full)
        col = jax.lax.broadcasted_iota(jnp.int32, t0.shape, 1)
        valid = col < tail
        t0 = jnp.where(valid, t0, 0.0)
        p0 = jnp.where(valid, p0, 0.0)
        st[rows, :] += t0
        sp[rows, :] += p0
        sqq[rows, :] += t0 * t0 + p0 * p0
        stp[rows, :] += t0 * p0


def _ccc_loss_kernel(pred_ref, true_ref, out_ref, st, sp, sqq, stp, *,
                     seq_len, num_t_steps, row_chunk):
    """One (bm, bt) tile per step; grid axis 1 (T) is the reduction axis."""
    kt = pl.program_id(1)
    bm, bt = pred_ref.shape

    @pl.when(kt == 0)
    def _init():
        st[...] = jnp.zeros_like(st)
        sp[...] = jnp.zeros_like(sp)
        sqq[...] = jnp.zeros_like(sqq)
        stp[...] = jnp.zeros_like(stp)

    def accum(n_cols):
        r0 = 0
        while r0 < bm:
            rm = min(row_chunk, bm - r0)
            _accum_rows(pred_ref, true_ref, st, sp, sqq, stp, r0, rm, n_cols)
            r0 += rm

    # Number of valid columns in the LAST reduction step (static).
    rem = seq_len - (num_t_steps - 1) * bt
    if rem == bt:
        # T divides evenly: every block is fully valid, no masking anywhere.
        accum(bt)
    else:
        if num_t_steps > 1:
            @pl.when(kt < num_t_steps - 1)
            def _full_blocks():
                accum(bt)

        @pl.when(kt == num_t_steps - 1)
        def _tail_block():
            accum(rem)

    @pl.when(kt == num_t_steps - 1)
    def _finalize():
        n = jnp.float32(seq_len)
        sum_t = jnp.sum(st[...], axis=1, keepdims=True)     # (bm, 1)
        sum_p = jnp.sum(sp[...], axis=1, keepdims=True)
        sum_qq = jnp.sum(sqq[...], axis=1, keepdims=True)   # Σ(t² + p²)
        sum_tp = jnp.sum(stp[...], axis=1, keepdims=True)

        mean_t = sum_t / n
        mean_p = sum_p / n
        # torch.var defaults to unbiased=True (ddof=1); covariance uses a
        # plain mean (ddof=0), matching the PyTorch forward exactly.
        # TODO(synk): seq_len == 1 divides by zero (n-1), same as
        # torch.var(unbiased=True); one-pass Σx²-(Σx)²/n can lose precision
        # when |mean| >> std for very long sequences.
        var_sum = (sum_qq - sum_t * mean_t - sum_p * mean_p) / (n - 1.0)
        cov = (sum_tp - sum_t * mean_p) / n

        ccc = 2.0 * cov / (var_sum + (mean_t - mean_p) ** 2)
        out_ref[...] = (1.0 - ccc).astype(out_ref.dtype)


def _round_up(x, m):
    return (x + m - 1) // m * m


def _min_sublane(*dtypes):
    # f32 -> 8 rows, bf16/f16 -> 16, 8-bit -> 32 (sub-32-bit sublane packing).
    return max(32 // min(jnp.dtype(d).itemsize, 4) for d in dtypes)


def ccc_loss(y_pred, y_true, *, bm=None, bt=None):
    """Pallas TPU implementation of ConcordanceCorrelationCoefficientLoss.

    Args:
      y_pred, y_true: arrays of shape (B, T), any float dtype (f32 / bf16 ...).
        They stream in their native dtype; math is f32 inside the kernel.
      bm, bt: optional tile overrides (batch rows / sequence columns).
    Returns:
      scalar float32 loss = mean_B(1 - CCC_row).
    """
    assert y_pred.ndim == 2 and y_pred.shape == y_true.shape
    B, T = y_pred.shape
    sub = _min_sublane(y_pred.dtype, y_true.dtype)

    if bt is None:
        cap = 8192 if T >= 8192 else 4096
        bt = min(_round_up(T, _LANE), cap)
    bt = _round_up(bt, _LANE)

    if bm is None:
        # >= 2 batch blocks whenever possible so v7x megacore can shard the
        # "parallel" axis across both TensorCores; prefer growing bt over bm.
        bm = min(_round_up(pl.cdiv(B, 2), sub), 128)
    bm = max(_round_up(bm, sub), sub)

    grid = (pl.cdiv(B, bm), pl.cdiv(T, bt))
    row_chunk = min(bm, 64)

    # Double-buffered input pipeline footprint; raise the scoped-VMEM limit
    # only if an override pushes past v5e's 16 MiB default (defaults here stay
    # <= 8 MiB, well inside every generation's scoped VMEM).
    itemsize = max(jnp.dtype(y_pred.dtype).itemsize,
                   jnp.dtype(y_true.dtype).itemsize)
    pipeline_bytes = 2 * 2 * bm * bt * itemsize
    vmem_limit = (64 << 20) if pipeline_bytes > (12 << 20) else None

    per_row = pl.pallas_call(
        functools.partial(_ccc_loss_kernel, seq_len=T,
                          num_t_steps=grid[1], row_chunk=row_chunk),
        out_shape=jax.ShapeDtypeStruct((B, 1), jnp.float32),
        grid=grid,
        in_specs=[
            pl.BlockSpec((bm, bt), lambda i, k: (i, k)),
            pl.BlockSpec((bm, bt), lambda i, k: (i, k)),
        ],
        out_specs=pl.BlockSpec((bm, 1), lambda i, k: (i, 0)),
        scratch_shapes=[pltpu.VMEM((bm, _LANE), jnp.float32)] * 4,
        compiler_params=pltpu.CompilerParams(
            dimension_semantics=("parallel", "arbitrary"),
            vmem_limit_bytes=vmem_limit),
    )(y_pred, y_true)

    # Final (tiny) mean over batch. Out-of-range rows of the last batch block
    # are dropped by Pallas, so per_row is exactly (B, 1).
    return jnp.mean(per_row)


def _ccc_loss_ref(y_pred, y_true):
    # Pure-JAX reference mirroring the PyTorch forward (for sanity checking).
    y_pred = y_pred.astype(jnp.float32)
    y_true = y_true.astype(jnp.float32)
    mean_true = jnp.mean(y_true, axis=1, keepdims=True)
    mean_pred = jnp.mean(y_pred, axis=1, keepdims=True)
    var_true = jnp.var(y_true, axis=1, keepdims=True, ddof=1)
    var_pred = jnp.var(y_pred, axis=1, keepdims=True, ddof=1)
    covariance = jnp.mean(
        (y_true - mean_true) * (y_pred - mean_pred), axis=1, keepdims=True
    )
    ccc = 2 * covariance / (var_true + var_pred + (mean_true - mean_pred) ** 2)
    return jnp.mean(1 - ccc)


if __name__ == "__main__":
    key = jax.random.PRNGKey(0)
    k1, k2, k3, k4, k5, k6 = jax.random.split(key, 6)

    # Case 1: f32, shapes that tile evenly (no masking path).
    B, T = 8, 256
    y_pred = jax.random.normal(k1, (B, T), dtype=jnp.float32)
    y_true = 0.7 * y_pred + 0.3 * jax.random.normal(k2, (B, T), dtype=jnp.float32)
    loss = jax.jit(ccc_loss)(y_pred, y_true)
    jax.block_until_ready(loss)
    ref = _ccc_loss_ref(y_pred, y_true)
    assert jnp.allclose(loss, ref, rtol=1e-4, atol=1e-4), (loss, ref)

    # Case 2: bf16 inputs with ragged B and T (exercises the in-kernel lane
    # mask and edge-block handling; bf16 streams, math in f32).
    B2, T2 = 10, 300
    yp2 = jax.random.normal(k3, (B2, T2), dtype=jnp.float32)
    yt2 = 0.6 * yp2 + 0.4 * jax.random.normal(k4, (B2, T2), dtype=jnp.float32)
    loss2 = jax.jit(ccc_loss)(yp2.astype(jnp.bfloat16), yt2.astype(jnp.bfloat16))
    jax.block_until_ready(loss2)
    ref2 = _ccc_loss_ref(yp2.astype(jnp.bfloat16), yt2.astype(jnp.bfloat16))
    assert jnp.allclose(loss2, ref2, rtol=5e-3, atol=5e-3), (loss2, ref2)

    # Case 3: f32, T smaller than one lane tile (pure masked-tail path).
    B3, T3 = 4, 96
    yp3 = jax.random.normal(k5, (B3, T3), dtype=jnp.float32)
    yt3 = 0.5 * yp3 + 0.5 * jax.random.normal(k6, (B3, T3), dtype=jnp.float32)
    loss3 = jax.jit(ccc_loss)(yp3, yt3)
    jax.block_until_ready(loss3)
    ref3 = _ccc_loss_ref(yp3, yt3)
    assert jnp.allclose(loss3, ref3, rtol=1e-4, atol=1e-4), (loss3, ref3)

    print("KERNEL_OK")
</pallas_src>

<mosaic_0001>
module attributes {stable_mosaic.version = 11 : i64} {
  func.func @_ccc_loss_kernel(%arg0: i32, %arg1: i32, %arg2: memref<8x256xf32, #tpu.memory_space<vmem>>, %arg3: memref<8x256xf32, #tpu.memory_space<vmem>>, %arg4: memref<8x1xf32, #tpu.memory_space<vmem>>, %arg5: memref<8x128xf32, #tpu.memory_space<vmem>>, %arg6: memref<8x128xf32, #tpu.memory_space<vmem>>, %arg7: memref<8x128xf32, #tpu.memory_space<vmem>>, %arg8: memref<8x128xf32, #tpu.memory_space<vmem>>) attributes {dimension_semantics = [#tpu.dimension_semantics<parallel>, #tpu.dimension_semantics<arbitrary>], iteration_bounds = array<i64: 1, 1>, scalar_prefetch = 0 : i64, scratch_operands = 4 : i64, tpu.core_type = #tpu.core_type<tc>, window_params = [{transform_indices = @transform_0, window_bounds = array<i64: 8, 256>}, {transform_indices = @transform_1, window_bounds = array<i64: 8, 256>}, {transform_indices = @transform_2, window_bounds = array<i64: 8, 1>}]} {
    %c0_i32 = arith.constant 0 : i32
    %0 = arith.cmpi eq, %arg1, %c0_i32 : i32
    %1 = arith.extui %0 : i1 to i32
    %c0_i32_0 = arith.constant 0 : i32
    %2 = arith.cmpi ne, %1, %c0_i32_0 : i32
    scf.if %2 {
      %cst = arith.constant 0.000000e+00 : f32
      %34 = vector.broadcast %cst : f32 to vector<8x128xf32>
      %c0_25 = arith.constant 0 : index
      %c0_26 = arith.constant 0 : index
      %35 = vector.load %arg5[%c0_25, %c0_26] : memref<8x128xf32, #tpu.memory_space<vmem>>, vector<8x128xf32>
      tpu.vector_store %arg5[%c0_25, %c0_26], %34 {strides = array<i32>} : memref<8x128xf32, #tpu.memory_space<vmem>>, vector<8x128xf32>,
      %cst_27 = arith.constant 0.000000e+00 : f32
      %36 = vector.broadcast %cst_27 : f32 to vector<8x128xf32>
      %c0_28 = arith.constant 0 : index
      %c0_29 = arith.constant 0 : index
      %37 = vector.load %arg6[%c0_28, %c0_29] : memref<8x128xf32, #tpu.memory_space<vmem>>, vector<8x128xf32>
      tpu.vector_store %arg6[%c0_28, %c0_29], %36 {strides = array<i32>} : memref<8x128xf32, #tpu.memory_space<vmem>>, vector<8x128xf32>,
      %cst_30 = arith.constant 0.000000e+00 : f32
      %38 = vector.broadcast %cst_30 : f32 to vector<8x128xf32>
      %c0_31 = arith.constant 0 : index
      %c0_32 = arith.constant 0 : index
      %39 = vector.load %arg7[%c0_31, %c0_32] : memref<8x128xf32, #tpu.memory_space<vmem>>, vector<8x128xf32>
      tpu.vector_store %arg7[%c0_31, %c0_32], %38 {strides = array<i32>} : memref<8x128xf32, #tpu.memory_space<vmem>>, vector<8x128xf32>,
      %cst_33 = arith.constant 0.000000e+00 : f32
      %40 = vector.broadcast %cst_33 : f32 to vector<8x128xf32>
      %c0_34 = arith.constant 0 : index
      %c0_35 = arith.constant 0 : index
      %41 = vector.load %arg8[%c0_34, %c0_35] : memref<8x128xf32, #tpu.memory_space<vmem>>, vector<8x128xf32>
      tpu.vector_store %arg8[%c0_34, %c0_35], %40 {strides = array<i32>} : memref<8x128xf32, #tpu.memory_space<vmem>>, vector<8x128xf32>,
    } else {
    }
    %c0 = arith.constant 0 : index
    %c0_1 = arith.constant 0 : index
    %3 = vector.load %arg3[%c0, %c0_1] : memref<8x256xf32, #tpu.memory_space<vmem>>, vector<8x128xf32>
    %c0_2 = arith.constant 0 : index
    %c128 = arith.constant 128 : index
    %4 = vector.load %arg3[%c0_2, %c128] : memref<8x256xf32, #tpu.memory_space<vmem>>, vector<8x128xf32>
    %c0_3 = arith.constant 0 : index
    %c0_4 = arith.constant 0 : index
    %5 = vector.load %arg2[%c0_3, %c0_4] : memref<8x256xf32, #tpu.memory_space<vmem>>, vector<8x128xf32>
    %c0_5 = arith.constant 0 : index
    %c128_6 = arith.constant 128 : index
    %6 = vector.load %arg2[%c0_5, %c128_6] : memref<8x256xf32, #tpu.memory_space<vmem>>, vector<8x128xf32>
    %c0_7 = arith.constant 0 : index
    %c0_8 = arith.constant 0 : index
    %7 = vector.load %arg5[%c0_7, %c0_8] : memref<8x128xf32, #tpu.memory_space<vmem>>, vector<8x128xf32>
    %8 = arith.addf %3, %4 : vector<8x128xf32>
    %9 = arith.addf %7, %8 : vector<8x128xf32>
    %c0_9 = arith.constant 0 : index
    %c0_10 = arith.constant 0 : index
    %10 = vector.load %arg5[%c0_9, %c0_10] : memref<8x128xf32, #tpu.memory_space<vmem>>, vector<8x128xf32>
    tpu.vector_store %arg5[%c0_9, %c0_10], %9 {strides = array<i32>} : memref<8x128xf32, #tpu.memory_space<vmem>>, vector<8x128xf32>,
    %c0_11 = arith.constant 0 : index
    %c0_12 = arith.constant 0 : index
    %11 = vector.load %arg6[%c0_11, %c0_12] : memref<8x128xf32, #tpu.memory_space<vmem>>, vector<8x128xf32>
    %12 = arith.addf %5, %6 : vector<8x128xf32>
    %13 = arith.addf %11, %12 : vector<8x128xf32>
    %c0_13 = arith.constant 0 : index
    %c0_14 = arith.constant 0 : index
    %14 = vector.load %arg6[%c0_13, %c0_14] : memref<8x128xf32, #tpu.memory_space<vmem>>, vector<8x128xf32>
    tpu.vector_store %arg6[%c0_13, %c0_14], %13 {strides = array<i32>} : memref<8x128xf32, #tpu.memory_space<vmem>>, vector<8x128xf32>,
    %c0_15 = arith.constant 0 : index
    %c0_16 = arith.constant 0 : index
    %15 = vector.load %arg7[%c0_15, %c0_16] : memref<8x128xf32, #tpu.memory_space<vmem>>, vector<8x128xf32>
    %16 = arith.mulf %3, %3 : vector<8x128xf32>
    %17 = arith.mulf %4, %4 : vector<8x128xf32>
    %18 = arith.addf %16, %17 : vector<8x128xf32>
    %19 = arith.mulf %5, %5 : vector<8x128xf32>
    %20 = arith.mulf %6, %6 : vector<8x128xf32>
    %21 = arith.addf %19, %20 : vector<8x128xf32>
    %22 = arith.addf %18, %21 : vector<8x128xf32>
    %23 = arith.addf %15, %22 : vector<8x128xf32>
    %c0_17 = arith.constant 0 : index
    %c0_18 = arith.constant 0 : index
    %24 = vector.load %arg7[%c0_17, %c0_18] : memref<8x128xf32, #tpu.memory_space<vmem>>, vector<8x128xf32>
    tpu.vector_store %arg7[%c0_17, %c0_18], %23 {strides = array<i32>} : memref<8x128xf32, #tpu.memory_space<vmem>>, vector<8x128xf32>,
    %c0_19 = arith.constant 0 : index
    %c0_20 = arith.constant 0 : index
    %25 = vector.load %arg8[%c0_19, %c0_20] : memref<8x128xf32, #tpu.memory_space<vmem>>, vector<8x128xf32>
    %26 = arith.mulf %3, %5 : vector<8x128xf32>
    %27 = arith.mulf %4, %6 : vector<8x128xf32>
    %28 = arith.addf %26, %27 : vector<8x128xf32>
    %29 = arith.addf %25, %28 : vector<8x128xf32>
    %c0_21 = arith.constant 0 : index
    %c0_22 = arith.constant 0 : index
    %30 = vector.load %arg8[%c0_21, %c0_22] : memref<8x128xf32, #tpu.memory_space<vmem>>, vector<8x128xf32>
    tpu.vector_store %arg8[%c0_21, %c0_22], %29 {strides = array<i32>} : memref<8x128xf32, #tpu.memory_space<vmem>>, vector<8x128xf32>,
    %c0_i32_23 = arith.constant 0 : i32
    %31 = arith.cmpi eq, %arg1, %c0_i32_23 : i32
    %32 = arith.extui %31 : i1 to i32
    %c0_i32_24 = arith.constant 0 : i32
    %33 = arith.cmpi ne, %32, %c0_i32_24 : i32
    scf.if %33 {
      %c0_25 = arith.constant 0 : index
      %c0_26 = arith.constant 0 : index
      %34 = vector.load %arg5[%c0_25, %c0_26] : memref<8x128xf32, #tpu.memory_space<vmem>>, vector<8x128xf32>
      %cst = arith.constant dense<0.000000e+00> : vector<8xf32>
      %35 = vector.multi_reduction <add>, %34, %cst [1] : vector<8x128xf32> to vector<8xf32>
      %36 = vector.shape_cast %35 : vector<8xf32> to vector<8x1xf32>
      %c0_27 = arith.constant 0 : index
      %c0_28 = arith.constant 0 : index
      %37 = vector.load %arg6[%c0_27, %c0_28] : memref<8x128xf32, #tpu.memory_space<vmem>>, vector<8x128xf32>
      %cst_29 = arith.constant dense<0.000000e+00> : vector<8xf32>
      %38 = vector.multi_reduction <add>, %37, %cst_29 [1] : vector<8x128xf32> to vector<8xf32>
      %39 = vector.shape_cast %38 : vector<8xf32> to vector<8x1xf32>
      %c0_30 = arith.constant 0 : index
      %c0_31 = arith.constant 0 : index
      %40 = vector.load %arg7[%c0_30, %c0_31] : memref<8x128xf32, #tpu.memory_space<vmem>>, vector<8x128xf32>
      %cst_32 = arith.constant dense<0.000000e+00> : vector<8xf32>
      %41 = vector.multi_reduction <add>, %40, %cst_32 [1] : vector<8x128xf32> to vector<8xf32>
      %42 = vector.shape_cast %41 : vector<8xf32> to vector<8x1xf32>
      %c0_33 = arith.constant 0 : index
      %c0_34 = arith.constant 0 : index
      %43 = vector.load %arg8[%c0_33, %c0_34] : memref<8x128xf32, #tpu.memory_space<vmem>>, vector<8x128xf32>
      %cst_35 = arith.constant dense<0.000000e+00> : vector<8xf32>
      %44 = vector.multi_reduction <add>, %43, %cst_35 [1] : vector<8x128xf32> to vector<8xf32>
      %45 = vector.shape_cast %44 : vector<8xf32> to vector<8x1xf32>
      %cst_36 = arith.constant 2.560000e+02 : f32
      %46 = vector.broadcast %cst_36 : f32 to vector<8x1xf32>
      %47 = arith.divf %36, %46 : vector<8x1xf32>
      %cst_37 = arith.constant 2.560000e+02 : f32
      %48 = vector.broadcast %cst_37 : f32 to vector<8x1xf32>
      %49 = arith.divf %39, %48 : vector<8x1xf32>
      %50 = arith.mulf %36, %47 : vector<8x1xf32>
      %51 = arith.subf %42, %50 : vector<8x1xf32>
      %52 = arith.mulf %39, %49 : vector<8x1xf32>
      %53 = arith.subf %51, %52 : vector<8x1xf32>
      %cst_38 = arith.constant 2.560000e+02 : f32
      %cst_39 = arith.constant 1.000000e+00 : f32
      %54 = arith.subf %cst_38, %cst_39 : f32
      %55 = vector.broadcast %54 : f32 to vector<8x1xf32>
      %56 = arith.divf %53, %55 : vector<8x1xf32>
      %57 = arith.mulf %36, %49 : vector<8x1xf32>
      %58 = arith.subf %45, %57 : vector<8x1xf32>
      %cst_40 = arith.constant 2.560000e+02 : f32
      %59 = vector.broadcast %cst_40 : f32 to vector<8x1xf32>
      %60 = arith.divf %58, %59 : vector<8x1xf32>
      %cst_41 = arith.constant 2.000000e+00 : f32
      %61 = vector.broadcast %cst_41 : f32 to vector<8x1xf32>
      %62 = arith.mulf %61, %60 : vector<8x1xf32>
      %63 = arith.subf %47, %49 : vector<8x1xf32>
      %64 = arith.mulf %63, %63 : vector<8x1xf32>
      %65 = arith.addf %56, %64 : vector<8x1xf32>
      %66 = arith.divf %62, %65 : vector<8x1xf32>
      %cst_42 = arith.constant 1.000000e+00 : f32
      %67 = vector.broadcast %cst_42 : f32 to vector<8x1xf32>
      %68 = arith.subf %67, %66 : vector<8x1xf32>
      %c0_43 = arith.constant 0 : index
      %c0_44 = arith.constant 0 : index
      %69 = vector.load %arg4[%c0_43, %c0_44] : memref<8x1xf32, #tpu.memory_space<vmem>>, vector<8x1xf32>
      tpu.vector_store %arg4[%c0_43, %c0_44], %68 {strides = array<i32>} : memref<8x1xf32, #tpu.memory_space<vmem>>, vector<8x1xf32>,
    } else {
    }
    return
  }
  func.func @transform_0(%arg0: i32, %arg1: i32) -> (i32, i32) {
    %c0_i32 = arith.constant 0 : i32
    return %arg0, %arg1 : i32, i32
  }
  func.func @transform_1(%arg0: i32, %arg1: i32) -> (i32, i32) {
    %c0_i32 = arith.constant 0 : i32
    return %arg0, %arg1 : i32, i32
  }
  func.func @transform_2(%arg0: i32, %arg1: i32) -> (i32, i32) {
    %c0_i32 = arith.constant 0 : i32
    %c0_i32_0 = arith.constant 0 : i32
    return %arg0, %c0_i32 : i32, i32
  }
}

</mosaic_0001>

<llo_original>
// kernel: ccc_loss.1
$region0: #{ccc_loss.1}
  #allocation0 [shape = 'u32[]', space=smem, size = 0x4, offset = 0x4, fixed_abs, tag = 'smem constant byte address 0x4 - core index']
  #allocation1 [shape = 'u32[144,128]{1,0:T(1,128)}', space=vmem, size = 0x12000, scoped, tag = 'internal scratch']
  #allocation2 [shape = 'f32[8,128]{1,0:T(8,128)}', space=vmem, size = 0x1000, scoped, tag = 'scratch operand']
  #allocation3 [shape = 'f32[8,128]{1,0:T(8,128)}', space=vmem, size = 0x1000, scoped, tag = 'scratch operand']
  #allocation4 [shape = 'f32[8,128]{1,0:T(8,128)}', space=vmem, size = 0x1000, scoped, tag = 'scratch operand']
  #allocation5 [shape = 'f32[8,128]{1,0:T(8,128)}', space=vmem, size = 0x1000, scoped, tag = 'scratch operand']
  %s0 = inlined_call_operand.hbm [shape: f32[8,256], index: 0, kind: input, shape index: {}]
  %s1 = inlined_call_operand.hbm [shape: f32[8,256], index: 1, kind: input, shape index: {}]
  %s2 = inlined_call_operand.vmem [shape: f32[8,1], index: 2, kind: output, shape index: {}]
  %s3 = sld [smem:[#allocation0]]
  $region34: #{ccc_loss.1} parent=0
    _
  %s5 = ssub.s32 1, %s3
  %s6 = scalar_select 0, %s5, %s3
  $region1: #{ccc_loss.1} parent=0
    #allocation6 [shape = 'u8[8192]{0}', space=vmem, size = 0x2000, scoped, tag = 'input window, operand 0, single buffered']
    #allocation7 [shape = 's32[1]{0}', space=sflag, size = 0x4, scoped, tag = 'scoped memory for ccc_loss.1']
    #allocation8 [shape = 'u8[8192]{0}', space=vmem, size = 0x2000, scoped, tag = 'input window, operand 1, single buffered']
    #allocation9 [shape = 's32[1]{0}', space=sflag, size = 0x4, scoped, tag = 'scoped memory for ccc_loss.1']
    %7 = vsyncpa [#allocation7], 0
    %8 = vsyncpa [#allocation9], 0
    // Predicated region
    $region2: #{ccc_loss.1} parent=1 // pred_check
      _
    $region3: #{ccc_loss.1} parent=1 // pred_check_branch
      %10 = sbr.rel (0) target = $region5
    $region4: #{ccc_loss.1} parent=1 // pred_region
      %s12 = ssub.s32 256, 256
      %13 = vsyncadd [#allocation7], %s12
      %s15 = sshll.u32 [#allocation6], 4
      %s16 = int_to_ptr.vmem [resolvable:$true] %s15
      %18 = dma.hbm_to_vmem [thread:$0]  %s0, 256, %s16, [#allocation7]
    $region5: #{ccc_loss.1} parent=1 // pred_fallthru
      _
    // Predicated region
    $region6: #{ccc_loss.1} parent=1 // pred_check
      _
    $region7: #{ccc_loss.1} parent=1 // pred_check_branch
      %20 = sbr.rel (0) target = $region9
    $region8: #{ccc_loss.1} parent=1 // pred_region
      %s22 = ssub.s32 256, 256
      %23 = vsyncadd [#allocation9], %s22
      %s25 = sshll.u32 [#allocation8], 4
      %s26 = int_to_ptr.vmem [resolvable:$true] %s25
      %28 = dma.hbm_to_vmem [thread:$0]  %s1, 256, %s26, [#allocation9]
    $region9: #{ccc_loss.1} parent=1 // pred_fallthru
      _
    // Predicated region
    $region10: #{ccc_loss.1} parent=1 // pred_check
      _
    $region11: #{ccc_loss.1} parent=1 // pred_check_branch
      %30 = sbr.rel (0) target = $region13
    $region12: #{ccc_loss.1} parent=1 // pred_region
      %31 = dma.done [#allocation7], 256
    $region13: #{ccc_loss.1} parent=1 // pred_fallthru
      _
    // Predicated region
    $region14: #{ccc_loss.1} parent=1 // pred_check
      _
    $region15: #{ccc_loss.1} parent=1 // pred_check_branch
      %33 = sbr.rel (0) target = $region17
    $region16: #{ccc_loss.1} parent=1 // pred_region
      %34 = dma.done [#allocation9], 256
    $region17: #{ccc_loss.1} parent=1 // pred_fallthru
      _
    %p35 = scmp.eq.s32.totalorder 0, 0
    // Predicated region
    $region18: #{ccc_loss.1} parent=1 // pred_check
      %p36 = pneg %p35
    $region19: #{ccc_loss.1} parent=1 // pred_check_branch
      %38 = sbr.rel (%p36) target = $region21
    $region20: #{ccc_loss.1} parent=1 // pred_region
      %39 = vst [vmem:[#allocation2] sm:$0xff] 0.0
      %40 = vst [vmem:[#allocation3] sm:$0xff] 0.0
      %41 = vst [vmem:[#allocation4] sm:$0xff] 0.0
      %42 = vst [vmem:[#allocation5] sm:$0xff] 0.0
    $region21: #{ccc_loss.1} parent=1 // pred_fallthru
      _
    %v43 = vld [vmem:[#allocation8] sm:$0xff]
    %v44 = vld [vmem:[#allocation8 + $0x8] sm:$0xff]
    %v45 = vld [vmem:[#allocation6] sm:$0xff]
    %v46 = vld [vmem:[#allocation6 + $0x8] sm:$0xff]
    %v47 = vld [vmem:[#allocation2] sm:$0xff]
    %v48 = vadd.f32 %v43, %v44
    %v49 = vadd.f32 %v47, %v48
    %50 = vst [vmem:[#allocation2] sm:$0xff] %v49
    %v51 = vld [vmem:[#allocation3] sm:$0xff]
    %v52 = vadd.f32 %v45, %v46
    %v53 = vadd.f32 %v51, %v52
    %54 = vst [vmem:[#allocation3] sm:$0xff] %v53
    %v55 = vld [vmem:[#allocation4] sm:$0xff]
    %v56 = vmul.f32 %v43, %v43
    %v57 = vmul.f32 %v44, %v44
    %v58 = vadd.f32 %v56, %v57
    %v59 = vmul.f32 %v45, %v45
    %v60 = vmul.f32 %v46, %v46
    %v61 = vadd.f32 %v59, %v60
    %v62 = vadd.f32 %v58, %v61
    %v63 = vadd.f32 %v55, %v62
    %64 = vst [vmem:[#allocation4] sm:$0xff] %v63
    %v65 = vld [vmem:[#allocation5] sm:$0xff]
    %v66 = vmul.f32 %v43, %v45
    %v67 = vmul.f32 %v44, %v46
    %v68 = vadd.f32 %v66, %v67
    %v69 = vadd.f32 %v65, %v68
    %70 = vst [vmem:[#allocation5] sm:$0xff] %v69
    // Predicated region
    $region22: #{ccc_loss.1} parent=1 // pred_check
      %p71 = pneg %p35
    $region23: #{ccc_loss.1} parent=1 // pred_check_branch
      %73 = sbr.rel (%p71) target = $region25
    $region24: #{ccc_loss.1} parent=1 // pred_region
      %v74 = vld [vmem:[#allocation2] sm:$0xff]
      %75 = vadd.xlane.f32.xlu0 %v74
      %v76 = vpop.xlane.xlu0 %75
      %v77 = vld [vmem:[#allocation3] sm:$0xff]
      %78 = vadd.xlane.f32.xlu0 %v77
      %v79 = vpop.xlane.xlu0 %78
      %v80 = vld [vmem:[#allocation4] sm:$0xff]
      %81 = vadd.xlane.f32.xlu0 %v80
      %v82 = vpop.xlane.xlu0 %81
      %v83 = vld [vmem:[#allocation5] sm:$0xff]
      %84 = vadd.xlane.f32.xlu0 %v83
      %v85 = vpop.xlane.xlu0 %84
      %v86 = vrcp.pop 256.0
      %v87 = vmul.f32 %v76, %v86
      %v88 = vmul.f32 %v79, %v86
      %v89 = vmul.f32 %v76, %v87
      %v90 = vsub.f32 %v82, %v89
      %v91 = vmul.f32 %v79, %v88
      %v92 = vsub.f32 %v90, %v91
      %v93 = vrcp.pop 255.0
      %v94 = vmul.f32 %v92, %v93
      %v95 = vmul.f32 %v76, %v88
      %v96 = vsub.f32 %v85, %v95
      %v97 = vmul.f32 %v96, %v86
      %v98 = vmul.f32 %v97, 2.0
      %v99 = vsub.f32 %v87, %v88
      %v100 = vmul.f32 %v99, %v99
      %v101 = vadd.f32 %v94, %v100
      %v102 = vrcp.pop %v101
      %v103 = vmul.f32 %v98, %v102
      %v104 = vsub.f32 1.0, %v103
      %vm105 = vcmask 7168
      %106 = vst.msk [vmem:[%s2] sm:$0xff] %vm105, %v104
    $region25: #{ccc_loss.1} parent=1 // pred_fallthru
      _
    // Predicated region
    $region26: #{ccc_loss.1} parent=1 // pred_check
      _
    $region27: #{ccc_loss.1} parent=1 // pred_check_branch
      %108 = sbr.rel (0) target = $region29
    $region28: #{ccc_loss.1} parent=1 // pred_region
      _
    $region29: #{ccc_loss.1} parent=1 // pred_fallthru
      _
    // Predicated region
    $region30: #{ccc_loss.1} parent=1 // pred_check
      _
    $region31: #{ccc_loss.1} parent=1 // pred_check_branch
      %110 = sbr.rel (0) target = $region33
    $region32: #{ccc_loss.1} parent=1 // pred_region
      _
    $region33: #{ccc_loss.1} parent=1 // pred_fallthru
      _
    %111 = vsyncpa [#allocation7], 1
    %112 = vsyncpa [#allocation9], 1

</llo_original>
